<compile_context>
chip_gen: v6e
topology: v6e:2x2x1
jax: 0.10.0
libtpu: 0.0.40
codegen_flags: <defaults>
</compile_context>

<pallas_src>
import functools

import jax
import jax.numpy as jnp
from jax.experimental import pallas as pl
from jax.experimental.pallas import tpu as pltpu

LN_EPS = 1e-5
LANE = 128


def _round_up(x, m):
    return ((x + m - 1) // m) * m


def _choose_row_tile(n, tm_max):
    """Row tile: multiple of 8, <= tm_max.

    Big enough to amortize the ~0.35 us per-grid-step pipeline overhead
    (>= 512 rows whenever N allows), small enough that the "parallel" row
    axis still has >= ~4 steps so v7x's two TensorCores both get work.
    """
    n8 = _round_up(max(n, 1), 8)
    if n8 <= 512:
        return n8                          # tiny problem: single grid step
    tile = _round_up(-(-n8 // 4), 8)       # aim for >= 4 grid steps
    tile = max(512, min(tile, tm_max))
    return min(tile, n8)


def _fused_head_kernel(layer_dims, *refs):
    """Fused [Linear->ReLU->LayerNorm]*L -> Linear for one row tile.

    Ref order: x_ref, (w_l, b_l) per hidden layer, w_out, b_out, o_ref.
    LayerNorm affines are already folded into the next Linear's (w, b).
    All feature dims except the input are zero-padded to 128 lanes.
    """
    x_ref = refs[0]
    o_ref = refs[-1]
    p = refs[1:-1]
    num_layers = len(layer_dims)

    h = x_ref[...]                                  # bf16 feeds the MXU directly
    for layer in range(num_layers):
        w_ref, b_ref = p[2 * layer], p[2 * layer + 1]
        inv_d = 1.0 / float(layer_dims[layer])      # REAL dim, not padded
        y = jnp.dot(h, w_ref[...], preferred_element_type=jnp.float32)
        y = y + b_ref[...]                          # bias is f32
        y = jnp.maximum(y, 0.0)                     # ReLU; zero pad lanes stay 0
        # Single-pass LayerNorm moments over the real feature dim.
        mean = jnp.sum(y, axis=-1, keepdims=True) * inv_d
        var = jnp.sum(y * y, axis=-1, keepdims=True) * inv_d - mean * mean
        var = jnp.maximum(var, 0.0)
        y = (y - mean) * jax.lax.rsqrt(var + LN_EPS)   # affine folded downstream
        h = y.astype(w_ref.dtype)                   # back to bf16 for next MXU op

    w_ref, b_ref = p[2 * num_layers], p[2 * num_layers + 1]
    y = jnp.dot(h, w_ref[...], preferred_element_type=jnp.float32) + b_ref[...]
    o_ref[...] = y.astype(o_ref.dtype)              # lane-dense (128-wide) store


def init_hate_head_params(key, hidden_size, shape, output_dim, dtype=jnp.float32):
    """Synthetic params matching the module's shapes.

    Returns a flat tuple: (W, b, gamma, beta) per hidden layer, then (W_out, b_out).
    gamma/beta are non-trivial so the LN-affine fold is actually exercised.
    """
    params = []
    prev = hidden_size
    for dim in shape:
        key, kw, kb, kg, kbt = jax.random.split(key, 5)
        scale = 1.0 / float(prev) ** 0.5
        params.append(jax.random.uniform(kw, (prev, dim), dtype, -scale, scale))
        params.append(jax.random.uniform(kb, (1, dim), dtype, -scale, scale))
        params.append(jax.random.uniform(kg, (1, dim), dtype, 0.5, 1.5))
        params.append(jax.random.uniform(kbt, (1, dim), dtype, -0.2, 0.2))
        prev = dim
    key, kw, kb = jax.random.split(key, 3)
    scale = 1.0 / float(prev) ** 0.5
    params.append(jax.random.uniform(kw, (prev, output_dim), dtype, -scale, scale))
    params.append(jax.random.uniform(kb, (1, output_dim), dtype, -scale, scale))
    return tuple(params)


def prepare_head_params(flat_params, hidden_size, shape, output_dim,
                        mxu_dtype=jnp.bfloat16):
    """Fold each LayerNorm affine into the NEXT Linear, zero-pad all layer
    output dims (and the final output dim) to 128 lanes, cast weights to bf16.

    Returns a flat tuple: (W_l, b_l) per hidden layer, then (W_out, b_out).
    Weights are bf16 (MXU operands); biases stay f32 (added post-matmul in f32).
    Zero pad columns keep padded activations exactly 0 after ReLU; zero pad
    rows make normalized pad lanes irrelevant to the next matmul.
    """
    num_layers = len(shape)
    prepped = []
    prev_real = hidden_size
    prev_pad = hidden_size            # input feature dim NOT padded (keeps HBM stream minimal)
    gamma_prev = None
    beta_prev = None
    for layer in range(num_layers):
        w, b, g, bt = (a.astype(jnp.float32) for a in flat_params[4 * layer:4 * layer + 4])
        if gamma_prev is not None:    # fold previous LayerNorm affine into this Linear
            b = b + beta_prev @ w
            w = gamma_prev.reshape(-1, 1) * w
        dim = shape[layer]
        d_pad = _round_up(dim, LANE)
        w_p = jnp.zeros((prev_pad, d_pad), jnp.float32).at[:prev_real, :dim].set(w)
        b_p = jnp.zeros((1, d_pad), jnp.float32).at[:, :dim].set(b)
        prepped += [w_p.astype(mxu_dtype), b_p]
        gamma_prev, beta_prev = g, bt
        prev_real, prev_pad = dim, d_pad

    w, b = (a.astype(jnp.float32) for a in flat_params[4 * num_layers:4 * num_layers + 2])
    if gamma_prev is not None:
        b = b + beta_prev @ w
        w = gamma_prev.reshape(-1, 1) * w
    o_pad = _round_up(output_dim, LANE)
    w_p = jnp.zeros((prev_pad, o_pad), jnp.float32).at[:prev_real, :output_dim].set(w)
    b_p = jnp.zeros((1, o_pad), jnp.float32).at[:, :output_dim].set(b)
    prepped += [w_p.astype(mxu_dtype), b_p]
    return tuple(prepped)


@functools.partial(jax.jit, static_argnames=("layer_dims", "out_dim", "tm"))
def hate_head_forward(hidden, prepped_params, *, layer_dims, out_dim, tm=2048):
    """HateHead.head forward on `hidden` of shape (N, hidden_size)."""
    n, h_in = hidden.shape
    num_layers = len(layer_dims)
    o_pad = prepped_params[-1].shape[1]

    x = hidden.astype(jnp.bfloat16)            # halves the only large HBM stream
    tm_eff = _choose_row_tile(n, tm)
    n_pad = _round_up(n, tm_eff)
    if n_pad != n:
        x = jnp.pad(x, ((0, n_pad - n), (0, 0)))

    grid = (n_pad // tm_eff,)
    in_specs = [pl.BlockSpec((tm_eff, h_in), lambda i: (i, 0))]
    for prm in prepped_params:                 # tiny full-block, VMEM-resident params
        in_specs.append(pl.BlockSpec(prm.shape, lambda i: (0, 0)))
    out_specs = pl.BlockSpec((tm_eff, o_pad), lambda i: (i, 0))

    # Advisory cost estimate for XLA's scheduler.
    flops = 0
    for layer in range(num_layers + 1):
        k, d = prepped_params[2 * layer].shape
        flops += 2 * n_pad * k * d
    param_bytes = sum(int(p.size) * jnp.dtype(p.dtype).itemsize for p in prepped_params)
    out_bytes = n_pad * o_pad * jnp.dtype(hidden.dtype).itemsize
    bytes_accessed = n_pad * h_in * 2 + out_bytes + param_bytes

    kernel = functools.partial(_fused_head_kernel, layer_dims)

    out = pl.pallas_call(
        kernel,
        out_shape=jax.ShapeDtypeStruct((n_pad, o_pad), hidden.dtype),
        grid_spec=pltpu.PrefetchScalarGridSpec(
            num_scalar_prefetch=0,
            grid=grid,
            in_specs=in_specs,
            out_specs=out_specs,
        ),
        compiler_params=pltpu.CompilerParams(
            dimension_semantics=("parallel",),
            # Explicit limit so big row tiles are safe under v5e's 16 MiB
            # default scoped-VMEM, while staying within v7x's 64 MiB physical.
            vmem_limit_bytes=32 * 1024 * 1024),
        cost_estimate=pl.CostEstimate(
            flops=flops,
            transcendentals=n_pad * num_layers,   # one rsqrt per row per LN
            bytes_accessed=bytes_accessed),
    )(x, *prepped_params)

    return out[:n, :out_dim]


def _reference_matched(hidden, prepped_params, layer_dims, out_dim):
    """Pure-JAX pipeline mirroring the kernel's numerics (folded/padded params,
    bf16 MXU operands, f32 LN math, single-pass moments)."""
    num_layers = len(layer_dims)
    h = hidden.astype(jnp.bfloat16)
    for layer in range(num_layers):
        w, b = prepped_params[2 * layer], prepped_params[2 * layer + 1]
        y = jnp.dot(h, w, preferred_element_type=jnp.float32) + b
        y = jnp.maximum(y, 0.0)
        inv_d = 1.0 / float(layer_dims[layer])
        mean = jnp.sum(y, axis=-1, keepdims=True) * inv_d
        var = jnp.maximum(jnp.sum(y * y, axis=-1, keepdims=True) * inv_d - mean * mean, 0.0)
        y = (y - mean) * jax.lax.rsqrt(var + LN_EPS)
        h = y.astype(jnp.bfloat16)
    w, b = prepped_params[2 * num_layers], prepped_params[2 * num_layers + 1]
    y = jnp.dot(h, w, preferred_element_type=jnp.float32) + b
    return y[:, :out_dim]


def _reference_forward_f32(hidden, flat_params, num_layers):
    """Exact f32 module semantics (Dropout = identity in eval mode)."""
    x = hidden.astype(jnp.float32)
    for layer in range(num_layers):
        w, b, g, bt = flat_params[4 * layer:4 * layer + 4]
        y = jnp.maximum(x @ w + b, 0.0)
        mean = jnp.mean(y, axis=-1, keepdims=True)
        var = jnp.mean((y - mean) ** 2, axis=-1, keepdims=True)
        x = (y - mean) * jax.lax.rsqrt(var + LN_EPS) * g + bt
    w, b = flat_params[4 * num_layers], flat_params[4 * num_layers + 1]
    return x @ w + b


if __name__ == "__main__":
    # Small shapes consistent with the module: hidden_size=32, shape=[64, 32],
    # output_dim=4; batch=2, seq=8 -> N = 16 token rows.
    batch, seq, hidden_size = 2, 8, 32
    head_shape = (64, 32)
    output_dim = 4

    key = jax.random.PRNGKey(0)
    key, kx = jax.random.split(key)
    hidden = jax.random.normal(kx, (batch * seq, hidden_size), jnp.float32)

    raw_params = init_hate_head_params(key, hidden_size, head_shape, output_dim)
    prepped = prepare_head_params(raw_params, hidden_size, head_shape, output_dim)

    out = hate_head_forward(hidden, prepped, layer_dims=tuple(head_shape),
                            out_dim=output_dim)
    out = jax.block_until_ready(out)
    assert out.shape == (batch * seq, output_dim)

    # Tight check vs a pure-JAX pipeline with the kernel's exact numeric scheme.
    ref_matched = _reference_matched(hidden, prepped, tuple(head_shape), output_dim)
    assert jnp.allclose(out, ref_matched, atol=2e-3, rtol=2e-3), "mismatch vs matched reference"

    # Loose check vs exact f32 module semantics (slack accounts for bf16 MXU operands).
    ref_f32 = _reference_forward_f32(hidden, raw_params, len(head_shape))
    assert jnp.allclose(out, ref_f32, atol=1e-1, rtol=1e-1), "mismatch vs f32 reference"

    # TODO(synk): Dropout is skipped (eval-mode identity); training-mode dropout
    # would need pltpu.prng_seed / prng_random_bits masking inside the kernel.
    print("KERNEL_OK")
</pallas_src>

<mosaic_0001>
module attributes {stable_mosaic.version = 11 : i64} {
  func.func @_fused_head_kernel(%arg0: i32, %arg1: memref<16x32xbf16, #tpu.memory_space<vmem>>, %arg2: memref<32x128xbf16, #tpu.memory_space<vmem>>, %arg3: memref<1x128xf32, #tpu.memory_space<vmem>>, %arg4: memref<128x128xbf16, #tpu.memory_space<vmem>>, %arg5: memref<1x128xf32, #tpu.memory_space<vmem>>, %arg6: memref<128x128xbf16, #tpu.memory_space<vmem>>, %arg7: memref<1x128xf32, #tpu.memory_space<vmem>>, %arg8: memref<16x128xf32, #tpu.memory_space<vmem>>) attributes {dimension_semantics = [#tpu.dimension_semantics<parallel>], iteration_bounds = array<i64: 1>, scalar_prefetch = 0 : i64, scratch_operands = 0 : i64, tpu.core_type = #tpu.core_type<tc>, window_params = [{transform_indices = @transform_0, window_bounds = array<i64: 16, 32>}, {pipeline_mode = #tpu.pipeline_mode<synchronous>, transform_indices = @transform_1, window_bounds = array<i64: 32, 128>}, {pipeline_mode = #tpu.pipeline_mode<synchronous>, transform_indices = @transform_2, window_bounds = array<i64: 1, 128>}, {pipeline_mode = #tpu.pipeline_mode<synchronous>, transform_indices = @transform_3, window_bounds = array<i64: 128, 128>}, {pipeline_mode = #tpu.pipeline_mode<synchronous>, transform_indices = @transform_4, window_bounds = array<i64: 1, 128>}, {pipeline_mode = #tpu.pipeline_mode<synchronous>, transform_indices = @transform_5, window_bounds = array<i64: 128, 128>}, {pipeline_mode = #tpu.pipeline_mode<synchronous>, transform_indices = @transform_6, window_bounds = array<i64: 1, 128>}, {transform_indices = @transform_7, window_bounds = array<i64: 16, 128>}]} {
    %c0 = arith.constant 0 : index
    %c0_0 = arith.constant 0 : index
    %0 = vector.load %arg1[%c0, %c0_0] : memref<16x32xbf16, #tpu.memory_space<vmem>>, vector<16x32xbf16>
    %c0_1 = arith.constant 0 : index
    %c0_2 = arith.constant 0 : index
    %1 = vector.load %arg2[%c0_1, %c0_2] : memref<32x128xbf16, #tpu.memory_space<vmem>>, vector<32x128xbf16>
    %cst = arith.constant dense<0.000000e+00> : vector<16x128xf32>
    %2 = tpu.matmul %0, %1, %cst {dimension_numbers = #tpu.dot_dimension_numbers<[1], [0], [0], [1], [0, 0, 1, 1], [], []>} : vector<16x32xbf16>, vector<32x128xbf16>, vector<16x128xf32> -> vector<16x128xf32>
    %c0_3 = arith.constant 0 : index
    %c0_4 = arith.constant 0 : index
    %3 = vector.load %arg3[%c0_3, %c0_4] : memref<1x128xf32, #tpu.memory_space<vmem>>, vector<1x128xf32>
    %4 = vector.broadcast %3 : vector<1x128xf32> to vector<16x128xf32>
    %5 = arith.addf %2, %4 : vector<16x128xf32>
    %cst_5 = arith.constant 0.000000e+00 : f32
    %6 = vector.broadcast %cst_5 : f32 to vector<16x128xf32>
    %7 = arith.maximumf %5, %6 : vector<16x128xf32>
    %cst_6 = arith.constant dense<0.000000e+00> : vector<16xf32>
    %8 = vector.multi_reduction <add>, %7, %cst_6 [1] : vector<16x128xf32> to vector<16xf32>
    %9 = vector.shape_cast %8 : vector<16xf32> to vector<16x1xf32>
    %cst_7 = arith.constant 1.562500e-02 : f32
    %10 = vector.broadcast %cst_7 : f32 to vector<16x1xf32>
    %11 = arith.mulf %9, %10 : vector<16x1xf32>
    %12 = arith.mulf %7, %7 : vector<16x128xf32>
    %cst_8 = arith.constant dense<0.000000e+00> : vector<16xf32>
    %13 = vector.multi_reduction <add>, %12, %cst_8 [1] : vector<16x128xf32> to vector<16xf32>
    %14 = vector.shape_cast %13 : vector<16xf32> to vector<16x1xf32>
    %cst_9 = arith.constant 1.562500e-02 : f32
    %15 = vector.broadcast %cst_9 : f32 to vector<16x1xf32>
    %16 = arith.mulf %14, %15 : vector<16x1xf32>
    %17 = arith.mulf %11, %11 : vector<16x1xf32>
    %18 = arith.subf %16, %17 : vector<16x1xf32>
    %cst_10 = arith.constant 0.000000e+00 : f32
    %19 = vector.broadcast %cst_10 : f32 to vector<16x1xf32>
    %20 = arith.maximumf %18, %19 : vector<16x1xf32>
    %21 = vector.broadcast %11 : vector<16x1xf32> to vector<16x128xf32>
    %22 = arith.subf %7, %21 : vector<16x128xf32>
    %cst_11 = arith.constant 9.99999974E-6 : f32
    %23 = vector.broadcast %cst_11 : f32 to vector<16x1xf32>
    %24 = arith.addf %20, %23 : vector<16x1xf32>
    %25 = math.rsqrt %24 : vector<16x1xf32>
    %26 = vector.broadcast %25 : vector<16x1xf32> to vector<16x128xf32>
    %27 = arith.mulf %22, %26 : vector<16x128xf32>
    %28 = arith.truncf %27 : vector<16x128xf32> to vector<16x128xbf16>
    %c0_12 = arith.constant 0 : index
    %c0_13 = arith.constant 0 : index
    %29 = vector.load %arg4[%c0_12, %c0_13] : memref<128x128xbf16, #tpu.memory_space<vmem>>, vector<128x128xbf16>
    %cst_14 = arith.constant dense<0.000000e+00> : vector<16x128xf32>
    %30 = tpu.matmul %28, %29, %cst_14 {dimension_numbers = #tpu.dot_dimension_numbers<[1], [0], [0], [1], [0, 0, 1, 1], [], []>} : vector<16x128xbf16>, vector<128x128xbf16>, vector<16x128xf32> -> vector<16x128xf32>
    %c0_15 = arith.constant 0 : index
    %c0_16 = arith.constant 0 : index
    %31 = vector.load %arg5[%c0_15, %c0_16] : memref<1x128xf32, #tpu.memory_space<vmem>>, vector<1x128xf32>
    %32 = vector.broadcast %31 : vector<1x128xf32> to vector<16x128xf32>
    %33 = arith.addf %30, %32 : vector<16x128xf32>
    %cst_17 = arith.constant 0.000000e+00 : f32
    %34 = vector.broadcast %cst_17 : f32 to vector<16x128xf32>
    %35 = arith.maximumf %33, %34 : vector<16x128xf32>
    %cst_18 = arith.constant dense<0.000000e+00> : vector<16xf32>
    %36 = vector.multi_reduction <add>, %35, %cst_18 [1] : vector<16x128xf32> to vector<16xf32>
    %37 = vector.shape_cast %36 : vector<16xf32> to vector<16x1xf32>
    %cst_19 = arith.constant 3.125000e-02 : f32
    %38 = vector.broadcast %cst_19 : f32 to vector<16x1xf32>
    %39 = arith.mulf %37, %38 : vector<16x1xf32>
    %40 = arith.mulf %35, %35 : vector<16x128xf32>
    %cst_20 = arith.constant dense<0.000000e+00> : vector<16xf32>
    %41 = vector.multi_reduction <add>, %40, %cst_20 [1] : vector<16x128xf32> to vector<16xf32>
    %42 = vector.shape_cast %41 : vector<16xf32> to vector<16x1xf32>
    %cst_21 = arith.constant 3.125000e-02 : f32
    %43 = vector.broadcast %cst_21 : f32 to vector<16x1xf32>
    %44 = arith.mulf %42, %43 : vector<16x1xf32>
    %45 = arith.mulf %39, %39 : vector<16x1xf32>
    %46 = arith.subf %44, %45 : vector<16x1xf32>
    %cst_22 = arith.constant 0.000000e+00 : f32
    %47 = vector.broadcast %cst_22 : f32 to vector<16x1xf32>
    %48 = arith.maximumf %46, %47 : vector<16x1xf32>
    %49 = vector.broadcast %39 : vector<16x1xf32> to vector<16x128xf32>
    %50 = arith.subf %35, %49 : vector<16x128xf32>
    %cst_23 = arith.constant 9.99999974E-6 : f32
    %51 = vector.broadcast %cst_23 : f32 to vector<16x1xf32>
    %52 = arith.addf %48, %51 : vector<16x1xf32>
    %53 = math.rsqrt %52 : vector<16x1xf32>
    %54 = vector.broadcast %53 : vector<16x1xf32> to vector<16x128xf32>
    %55 = arith.mulf %50, %54 : vector<16x128xf32>
    %56 = arith.truncf %55 : vector<16x128xf32> to vector<16x128xbf16>
    %c0_24 = arith.constant 0 : index
    %c0_25 = arith.constant 0 : index
    %57 = vector.load %arg6[%c0_24, %c0_25] : memref<128x128xbf16, #tpu.memory_space<vmem>>, vector<128x128xbf16>
    %cst_26 = arith.constant dense<0.000000e+00> : vector<16x128xf32>
    %58 = tpu.matmul %56, %57, %cst_26 {dimension_numbers = #tpu.dot_dimension_numbers<[1], [0], [0], [1], [0, 0, 1, 1], [], []>} : vector<16x128xbf16>, vector<128x128xbf16>, vector<16x128xf32> -> vector<16x128xf32>
    %c0_27 = arith.constant 0 : index
    %c0_28 = arith.constant 0 : index
    %59 = vector.load %arg7[%c0_27, %c0_28] : memref<1x128xf32, #tpu.memory_space<vmem>>, vector<1x128xf32>
    %60 = vector.broadcast %59 : vector<1x128xf32> to vector<16x128xf32>
    %61 = arith.addf %58, %60 : vector<16x128xf32>
    %c0_29 = arith.constant 0 : index
    %c0_30 = arith.constant 0 : index
    %62 = vector.load %arg8[%c0_29, %c0_30] : memref<16x128xf32, #tpu.memory_space<vmem>>, vector<16x128xf32>
    tpu.vector_store %arg8[%c0_29, %c0_30], %61 {strides = array<i32>} : memref<16x128xf32, #tpu.memory_space<vmem>>, vector<16x128xf32>,
    return
  }
  func.func @transform_0(%arg0: i32) -> (i32, i32) {
    %c0_i32 = arith.constant 0 : i32
    %c0_i32_0 = arith.constant 0 : i32
    return %arg0, %c0_i32 : i32, i32
  }
  func.func @transform_1(%arg0: i32) -> (i32, i32) {
    %c0_i32 = arith.constant 0 : i32
    %c0_i32_0 = arith.constant 0 : i32
    %c0_i32_1 = arith.constant 0 : i32
    return %c0_i32, %c0_i32_0 : i32, i32
  }
  func.func @transform_2(%arg0: i32) -> (i32, i32) {
    %c0_i32 = arith.constant 0 : i32
    %c0_i32_0 = arith.constant 0 : i32
    %c0_i32_1 = arith.constant 0 : i32
    return %c0_i32, %c0_i32_0 : i32, i32
  }
  func.func @transform_3(%arg0: i32) -> (i32, i32) {
    %c0_i32 = arith.constant 0 : i32
    %c0_i32_0 = arith.constant 0 : i32
    %c0_i32_1 = arith.constant 0 : i32
    return %c0_i32, %c0_i32_0 : i32, i32
  }
  func.func @transform_4(%arg0: i32) -> (i32, i32) {
    %c0_i32 = arith.constant 0 : i32
    %c0_i32_0 = arith.constant 0 : i32
    %c0_i32_1 = arith.constant 0 : i32
    return %c0_i32, %c0_i32_0 : i32, i32
  }
  func.func @transform_5(%arg0: i32) -> (i32, i32) {
    %c0_i32 = arith.constant 0 : i32
    %c0_i32_0 = arith.constant 0 : i32
    %c0_i32_1 = arith.constant 0 : i32
    return %c0_i32, %c0_i32_0 : i32, i32
  }
  func.func @transform_6(%arg0: i32) -> (i32, i32) {
    %c0_i32 = arith.constant 0 : i32
    %c0_i32_0 = arith.constant 0 : i32
    %c0_i32_1 = arith.constant 0 : i32
    return %c0_i32, %c0_i32_0 : i32, i32
  }
  func.func @transform_7(%arg0: i32) -> (i32, i32) {
    %c0_i32 = arith.constant 0 : i32
    %c0_i32_0 = arith.constant 0 : i32
    return %arg0, %c0_i32 : i32, i32
  }
}

</mosaic_0001>

<llo_original>
// kernel: hate_head_forward.1
$region0: #{hate_head_forward.1}
  #allocation0 [shape = 'u32[]', space=smem, size = 0x4, offset = 0x4, fixed_abs, tag = 'smem constant byte address 0x4 - core index']
  #allocation1 [shape = 'u32[144,128]{1,0:T(1,128)}', space=vmem, size = 0x12000, scoped, tag = 'internal scratch']
  %s0 = inlined_call_operand.vmem [shape: bf16[16,32], index: 0, kind: input, shape index: {}]
  %s1 = inlined_call_operand.vmem [shape: bf16[32,128], index: 1, kind: input, shape index: {}]
  %s2 = inlined_call_operand.vmem [shape: f32[1,128], index: 2, kind: input, shape index: {}]
  %s3 = inlined_call_operand.hbm [shape: bf16[128,128], index: 3, kind: input, shape index: {}]
  %s4 = inlined_call_operand.vmem [shape: f32[1,128], index: 4, kind: input, shape index: {}]
  %s5 = inlined_call_operand.hbm [shape: bf16[128,128], index: 5, kind: input, shape index: {}]
  %s6 = inlined_call_operand.vmem [shape: f32[1,128], index: 6, kind: input, shape index: {}]
  %s7 = inlined_call_operand.vmem [shape: f32[16,128], index: 7, kind: output, shape index: {}]
  %s8 = sld [smem:[#allocation0]]
  $region46: #{hate_head_forward.1} parent=0
    _
  %s10 = ssub.s32 1, %s8
  %s11 = scalar_select 0, %s10, %s8
  $region1: #{hate_head_forward.1} parent=0
    #allocation2 [shape = 'u8[32768]{0}', space=vmem, size = 0x8000, scoped, tag = 'input window, operand 3, single buffered']
    #allocation3 [shape = 's32[1]{0}', space=sflag, size = 0x4, scoped, tag = 'scoped memory for hate_head_forward.1']
    #allocation4 [shape = 'u8[32768]{0}', space=vmem, size = 0x8000, scoped, tag = 'input window, operand 5, single buffered']
    #allocation5 [shape = 's32[1]{0}', space=sflag, size = 0x4, scoped, tag = 'scoped memory for hate_head_forward.1']
    %12 = vsyncpa [#allocation3], 0
    %13 = vsyncpa [#allocation5], 0
    // Predicated region
    $region2: #{hate_head_forward.1} parent=1 // pred_check
      _
    $region3: #{hate_head_forward.1} parent=1 // pred_check_branch
      %15 = sbr.rel (0) target = $region5
    $region4: #{hate_head_forward.1} parent=1 // pred_region
      _
    $region5: #{hate_head_forward.1} parent=1 // pred_fallthru
      _
    // Predicated region
    $region6: #{hate_head_forward.1} parent=1 // pred_check
      _
    $region7: #{hate_head_forward.1} parent=1 // pred_check_branch
      %17 = sbr.rel (0) target = $region9
    $region8: #{hate_head_forward.1} parent=1 // pred_region
      _
    $region9: #{hate_head_forward.1} parent=1 // pred_fallthru
      _
    // Predicated region
    $region10: #{hate_head_forward.1} parent=1 // pred_check
      _
    $region11: #{hate_head_forward.1} parent=1 // pred_check_branch
      %19 = sbr.rel (0) target = $region13
    $region12: #{hate_head_forward.1} parent=1 // pred_region
      _
    $region13: #{hate_head_forward.1} parent=1 // pred_fallthru
      _
    // Predicated region
    $region14: #{hate_head_forward.1} parent=1 // pred_check
      _
    $region15: #{hate_head_forward.1} parent=1 // pred_check_branch
      %21 = sbr.rel (0) target = $region17
    $region16: #{hate_head_forward.1} parent=1 // pred_region
      %s23 = ssub.s32 1024, 1024
      %24 = vsyncadd [#allocation3], %s23
      %s25 = sshll.u32 [#allocation2], 4
      %s26 = int_to_ptr.vmem [resolvable:$true] %s25
      %31 = dma.hbm_to_vmem [thread:$0]  %s3, 1024, %s26, [#allocation3], 64, 64, 4
    $region17: #{hate_head_forward.1} parent=1 // pred_fallthru
      _
    // Predicated region
    $region18: #{hate_head_forward.1} parent=1 // pred_check
      _
    $region19: #{hate_head_forward.1} parent=1 // pred_check_branch
      %33 = sbr.rel (0) target = $region21
    $region20: #{hate_head_forward.1} parent=1 // pred_region
      _
    $region21: #{hate_head_forward.1} parent=1 // pred_fallthru
      _
    // Predicated region
    $region22: #{hate_head_forward.1} parent=1 // pred_check
      _
    $region23: #{hate_head_forward.1} parent=1 // pred_check_branch
      %35 = sbr.rel (0) target = $region25
    $region24: #{hate_head_forward.1} parent=1 // pred_region
      %s37 = ssub.s32 1024, 1024
      %38 = vsyncadd [#allocation5], %s37
      %s39 = sshll.u32 [#allocation4], 4
      %s40 = int_to_ptr.vmem [resolvable:$true] %s39
      %45 = dma.hbm_to_vmem [thread:$0]  %s5, 1024, %s40, [#allocation5], 64, 64, 4
    $region25: #{hate_head_forward.1} parent=1 // pred_fallthru
      _
    // Predicated region
    $region26: #{hate_head_forward.1} parent=1 // pred_check
      _
    $region27: #{hate_head_forward.1} parent=1 // pred_check_branch
      %47 = sbr.rel (0) target = $region29
    $region28: #{hate_head_forward.1} parent=1 // pred_region
      _
    $region29: #{hate_head_forward.1} parent=1 // pred_fallthru
      _
    // Predicated region
    $region30: #{hate_head_forward.1} parent=1 // pred_check
      _
    $region31: #{hate_head_forward.1} parent=1 // pred_check_branch
      %49 = sbr.rel (0) target = $region33
    $region32: #{hate_head_forward.1} parent=1 // pred_region
      %50 = dma.done [#allocation3], 1024
    $region33: #{hate_head_forward.1} parent=1 // pred_fallthru
      _
    // Predicated region
    $region34: #{hate_head_forward.1} parent=1 // pred_check
      _
    $region35: #{hate_head_forward.1} parent=1 // pred_check_branch
      %52 = sbr.rel (0) target = $region37
    $region36: #{hate_head_forward.1} parent=1 // pred_region
      %53 = dma.done [#allocation5], 1024
    $region37: #{hate_head_forward.1} parent=1 // pred_fallthru
      _
    %v55 = vld [vmem:[%s0] sm:$0xf]
    %v56 = vld [vmem:[%s0 + $0x4] sm:$0xf]
    %v57 = vld [vmem:[%s1] sm:$0xf]
    %v58 = vld [vmem:[%s1 + $0x4] sm:$0xf]
    %v59 = vld [vmem:[%s1 + $0x8] sm:$0xf]
    %v60 = vld [vmem:[%s1 + $0xc] sm:$0xf]
    %v61 = vld [vmem:[%s2] sm:$0x1]
    %v63 = vlaneseq
    %v64 = vshrl.u32 %v63, 7
    %v65 = vsub.s32 0, %v64
    %v66 = vrot.slane %v61, %v65
    %v70 = vunpack.c.l.b16 %v55
    %v71 = vunpack.c.l.b16 %v56
    %v72 = vpack.c.b16 %v71, %v70
    %v77 = vunpack.c.l.b16 %v57
    %v78 = vunpack.c.l.b16 %v58
    %v79 = vunpack.c.l.b16 %v59
    %v80 = vunpack.c.l.b16 %v60
    %v81 = vpack.c.b16 %v78, %v77
    %v82 = vpack.c.b16 %v80, %v79
    %vm85 = vcmask 261120
    %v87 = vsel %vm85, %v72, 0
    %89 = vmatprep.subr.bf16.mxu0 0
    %90 = vmatpush1.bf16.msra.mxu0 0
    %91 = vmatprep.subr.bf16.mxu0 0
    %92 = vmatpush1.bf16.msra.mxu0 0
    %93 = vmatprep.subr.bf16.mxu0 0
    %94 = vmatpush1.bf16.msra.mxu0 0
    %95 = vmatprep.subr.bf16.mxu0 0
    %96 = vmatpush1.bf16.msra.mxu0 0
    %97 = vmatprep.subr.bf16.mxu0 0
    %98 = vmatpush1.bf16.msra.mxu0 0
    %99 = vmatprep.subr.bf16.mxu0 0
    %100 = vmatpush1.bf16.msra.mxu0 0
    %101 = vmatprep.subr.bf16.mxu0 0
    %102 = vmatpush1.bf16.msra.mxu0 %v82
    %103 = vmatprep.subr.bf16.mxu0 0
    %104 = vmatpush1.bf16.msra.mxu0 %v81
    %105 = vmatprep.subr.bf16.mxu0 0
    %106 = vmatpush2.bf16.msra.mxu0 0
    %107 = vmatprep.subr.bf16.mxu0 0
    %108 = vmatpush2.bf16.msra.mxu0 0
    %109 = vmatprep.subr.bf16.mxu0 0
    %110 = vmatpush2.bf16.msra.mxu0 0
    %111 = vmatprep.subr.bf16.mxu0 0
    %112 = vmatpush2.bf16.msra.mxu0 0
    %113 = vmatprep.subr.bf16.mxu0 0
    %114 = vmatpush2.bf16.msra.mxu0 0
    %115 = vmatprep.subr.bf16.mxu0 0
    %116 = vmatpush2.bf16.msra.mxu0 0
    %117 = vmatprep.subr.bf16.mxu0 0
    %118 = vmatpush2.bf16.msra.mxu0 0
    %119 = vmatprep.subr.bf16.mxu0 0
    %120 = vmatpush2.bf16.msra.mxu0 0
    %121 = vmatprep.mubr.bf16.mxu0 0
    %122 = vmatmul.mubr.bf16.gmra.mxu0 %v87
    %v123 = vpop.f32.mrf.mxu0
    %v124 = vadd.f32 %v66, %v123
    %v125 = vpop.f32.mrf.mxu0
    %v126 = vpop.f32.mrf.mxu0
    %v127 = vadd.f32 %v66, %v126
    %v128 = vpop.f32.mrf.mxu0
    %129 = vdwg.mxu0
    %v130 = vmax.f32 %v124, 0.0
    %v131 = vmax.f32 %v127, 0.0
    %132 = vadd.xlane.f32.xlu0 %v130
    %v133 = vpop.xlane.xlu0 %132
    %134 = vadd.xlane.f32.xlu0 %v131
    %v135 = vpop.xlane.xlu0 %134
    %v136 = vmul.f32 %v133, 0.015625
    %v137 = vmul.f32 %v135, 0.015625
    %v138 = vmul.f32 %v130, %v130
    %v139 = vmul.f32 %v131, %v131
    %140 = vadd.xlane.f32.xlu0 %v138
    %v141 = vpop.xlane.xlu0 %140
    %142 = vadd.xlane.f32.xlu0 %v139
    %v143 = vpop.xlane.xlu0 %142
    %v144 = vmul.f32 %v141, 0.015625
    %v145 = vmul.f32 %v143, 0.015625
    %v146 = vmul.f32 %v136, %v136
    %v147 = vmul.f32 %v137, %v137
    %v148 = vsub.f32 %v144, %v146
    %v149 = vsub.f32 %v145, %v147
    %v150 = vmax.f32 %v148, 0.0
    %v151 = vmax.f32 %v149, 0.0
    %v152 = vsub.f32 %v130, %v136
    %v153 = vsub.f32 %v131, %v137
    %v154 = vadd.f32 %v150, 1e-05
    %v155 = vadd.f32 %v151, 1e-05
    %v156 = vrsqrt.pop %v154
    %v157 = vrsqrt.pop %v155
    %v158 = vmul.f32 %v152, %v156
    %v159 = vmul.f32 %v153, %v157
    %v160 = vpack.c.bf16 %v159, %v158
    %v161 = vld [vmem:[#allocation2] sm:$0xf]
    %v162 = vld [vmem:[#allocation2 + $0x4] sm:$0xf]
    %v163 = vld [vmem:[#allocation2 + $0x8] sm:$0xf]
    %v164 = vld [vmem:[#allocation2 + $0xc] sm:$0xf]
    %v165 = vld [vmem:[#allocation2 + $0x10] sm:$0xf]
    %v166 = vld [vmem:[#allocation2 + $0x14] sm:$0xf]
    %v167 = vld [vmem:[#allocation2 + $0x18] sm:$0xf]
    %v168 = vld [vmem:[#allocation2 + $0x1c] sm:$0xf]
    %v169 = vld [vmem:[#allocation2 + $0x20] sm:$0xf]
    %v170 = vld [vmem:[#allocation2 + $0x24] sm:$0xf]
    %v171 = vld [vmem:[#allocation2 + $0x28] sm:$0xf]
    %v172 = vld [vmem:[#allocation2 + $0x2c] sm:$0xf]
    %v173 = vld [vmem:[#allocation2 + $0x30] sm:$0xf]
    %v174 = vld [vmem:[#allocation2 + $0x34] sm:$0xf]
    %v175 = vld [vmem:[#allocation2 + $0x38] sm:$0xf]
    %v176 = vld [vmem:[#allocation2 + $0x3c] sm:$0xf]
    %v177 = vld [vmem:[%s4] sm:$0x1]
    %v179 = vlaneseq
    %v180 = vshrl.u32 %v179, 7
    %v181 = vsub.s32 0, %v180
    %v182 = vrot.slane %v177, %v181
    %v200 = vunpack.c.l.b16 %v161
    %v201 = vunpack.c.l.b16 %v162
    %v202 = vunpack.c.l.b16 %v163
    %v203 = vunpack.c.l.b16 %v164
    %v204 = vunpack.c.l.b16 %v165
    %v205 = vunpack.c.l.b16 %v166
    %v206 = vunpack.c.l.b16 %v167
    %v207 = vunpack.c.l.b16 %v168
    %v208 = vunpack.c.l.b16 %v169
    %v209 = vunpack.c.l.b16 %v170
    %v210 = vunpack.c.l.b16 %v171
    %v211 = vunpack.c.l.b16 %v172
    %v212 = vunpack.c.l.b16 %v173
    %v213 = vunpack.c.l.b16 %v174
    %v214 = vunpack.c.l.b16 %v175
    %v215 = vunpack.c.l.b16 %v176
    %v216 = vpack.c.b16 %v201, %v200
    %v217 = vpack.c.b16 %v203, %v202
    %v218 = vpack.c.b16 %v205, %v204
    %v219 = vpack.c.b16 %v207, %v206
    %v220 = vpack.c.b16 %v209, %v208
    %v221 = vpack.c.b16 %v211, %v210
    %v222 = vpack.c.b16 %v213, %v212
    %v223 = vpack.c.b16 %v215, %v214
    %232 = vmatprep.subr.bf16.mxu0 0
    %233 = vmatpush1.bf16.msra.mxu0 %v223
    %234 = vmatprep.subr.bf16.mxu0 0
    %235 = vmatpush1.bf16.msra.mxu0 %v222
    %236 = vmatprep.subr.bf16.mxu0 0
    %237 = vmatpush1.bf16.msra.mxu0 %v221
    %238 = vmatprep.subr.bf16.mxu0 0
    %239 = vmatpush1.bf16.msra.mxu0 %v220
    %240 = vmatprep.subr.bf16.mxu0 0
    %241 = vmatpush1.bf16.msra.mxu0 %v219
    %242 = vmatprep.subr.bf16.mxu0 0
    %243 = vmatpush1.bf16.msra.mxu0 %v218
    %244 = vmatprep.subr.bf16.mxu0 0
    %245 = vmatpush1.bf16.msra.mxu0 %v217
    %246 = vmatprep.subr.bf16.mxu0 0
    %247 = vmatpush1.bf16.msra.mxu0 %v216
    %248 = vmatprep.subr.bf16.mxu0 0
    %249 = vmatpush2.bf16.msra.mxu0 0
    %250 = vmatprep.subr.bf16.mxu0 0
    %251 = vmatpush2.bf16.msra.mxu0 0
    %252 = vmatprep.subr.bf16.mxu0 0
    %253 = vmatpush2.bf16.msra.mxu0 0
    %254 = vmatprep.subr.bf16.mxu0 0
    %255 = vmatpush2.bf16.msra.mxu0 0
    %256 = vmatprep.subr.bf16.mxu0 0
    %257 = vmatpush2.bf16.msra.mxu0 0
    %258 = vmatprep.subr.bf16.mxu0 0
    %259 = vmatpush2.bf16.msra.mxu0 0
    %260 = vmatprep.subr.bf16.mxu0 0
    %261 = vmatpush2.bf16.msra.mxu0 0
    %262 = vmatprep.subr.bf16.mxu0 0
    %263 = vmatpush2.bf16.msra.mxu0 0
    %264 = vmatprep.mubr.bf16.mxu0 0
    %265 = vmatmul.mubr.bf16.gmra.mxu0 %v160
    %v266 = vpop.f32.mrf.mxu0
    %v267 = vadd.f32 %v182, %v266
    %v268 = vpop.f32.mrf.mxu0
    %v269 = vpop.f32.mrf.mxu0
    %v270 = vadd.f32 %v182, %v269
    %v271 = vpop.f32.mrf.mxu0
    %272 = vdwg.mxu0
    %v273 = vmax.f32 %v267, 0.0
    %v274 = vmax.f32 %v270, 0.0
    %275 = vadd.xlane.f32.xlu0 %v273
    %v276 = vpop.xlane.xlu0 %275
    %277 = vadd.xlane.f32.xlu0 %v274
    %v278 = vpop.xlane.xlu0 %277
    %v279 = vmul.f32 %v276, 0.03125
    %v280 = vmul.f32 %v278, 0.03125
    %v281 = vmul.f32 %v273, %v273
    %v282 = vmul.f32 %v274, %v274
    %283 = vadd.xlane.f32.xlu0 %v281
    %v284 = vpop.xlane.xlu0 %283
    %285 = vadd.xlane.f32.xlu0 %v282
    %v286 = vpop.xlane.xlu0 %285
    %v287 = vmul.f32 %v284, 0.03125
    %v288 = vmul.f32 %v286, 0.03125
    %v289 = vmul.f32 %v279, %v279
    %v290 = vmul.f32 %v280, %v280
    %v291 = vsub.f32 %v287, %v289
    %v292 = vsub.f32 %v288, %v290
    %v293 = vmax.f32 %v291, 0.0
    %v294 = vmax.f32 %v292, 0.0
    %v295 = vsub.f32 %v273, %v279
    %v296 = vsub.f32 %v274, %v280
    %v297 = vadd.f32 %v293, 1e-05
    %v298 = vadd.f32 %v294, 1e-05
    %v299 = vrsqrt.pop %v297
    %v300 = vrsqrt.pop %v298
    %v301 = vmul.f32 %v295, %v299
    %v302 = vmul.f32 %v296, %v300
    %v303 = vpack.c.bf16 %v302, %v301
    %v304 = vld [vmem:[#allocation4] sm:$0xf]
    %v305 = vld [vmem:[#allocation4 + $0x4] sm:$0xf]
    %v306 = vld [vmem:[#allocation4 + $0x8] sm:$0xf]
    %v307 = vld [vmem:[#allocation4 + $0xc] sm:$0xf]
    %v308 = vld [vmem:[#allocation4 + $0x10] sm:$0xf]
    %v309 = vld [vmem:[#allocation4 + $0x14] sm:$0xf]
    %v310 = vld [vmem:[#allocation4 + $0x18] sm:$0xf]
    %v311 = vld [vmem:[#allocation4 + $0x1c] sm:$0xf]
    %v312 = vld [vmem:[#allocation4 + $0x20] sm:$0xf]
    %v313 = vld [vmem:[#allocation4 + $0x24] sm:$0xf]
    %v314 = vld [vmem:[#allocation4 + $0x28] sm:$0xf]
    %v315 = vld [vmem:[#allocation4 + $0x2c] sm:$0xf]
    %v316 = vld [vmem:[#allocation4 + $0x30] sm:$0xf]
    %v317 = vld [vmem:[#allocation4 + $0x34] sm:$0xf]
    %v318 = vld [vmem:[#allocation4 + $0x38] sm:$0xf]
    %v319 = vld [vmem:[#allocation4 + $0x3c] sm:$0xf]
    %v320 = vld [vmem:[%s6] sm:$0x1]
    %v322 = vlaneseq
    %v323 = vshrl.u32 %v322, 7
    %v324 = vsub.s32 0, %v323
    %v325 = vrot.slane %v320, %v324
    %v343 = vunpack.c.l.b16 %v304
    %v344 = vunpack.c.l.b16 %v305
    %v345 = vunpack.c.l.b16 %v306
    %v346 = vunpack.c.l.b16 %v307
    %v347 = vunpack.c.l.b16 %v308
    %v348 = vunpack.c.l.b16 %v309
    %v349 = vunpack.c.l.b16 %v310
    %v350 = vunpack.c.l.b16 %v311
    %v351 = vunpack.c.l.b16 %v312
    %v352 = vunpack.c.l.b16 %v313
    %v353 = vunpack.c.l.b16 %v314
    %v354 = vunpack.c.l.b16 %v315
    %v355 = vunpack.c.l.b16 %v316
    %v356 = vunpack.c.l.b16 %v317
    %v357 = vunpack.c.l.b16 %v318
    %v358 = vunpack.c.l.b16 %v319
    %v359 = vpack.c.b16 %v344, %v343
    %v360 = vpack.c.b16 %v346, %v345
    %v361 = vpack.c.b16 %v348, %v347
    %v362 = vpack.c.b16 %v350, %v349
    %v363 = vpack.c.b16 %v352, %v351
    %v364 = vpack.c.b16 %v354, %v353
    %v365 = vpack.c.b16 %v356, %v355
    %v366 = vpack.c.b16 %v358, %v357
    %375 = vmatprep.subr.bf16.mxu0 0
    %376 = vmatpush1.bf16.msra.mxu0 %v366
    %377 = vmatprep.subr.bf16.mxu0 0
    %378 = vmatpush1.bf16.msra.mxu0 %v365
    %379 = vmatprep.subr.bf16.mxu0 0
    %380 = vmatpush1.bf16.msra.mxu0 %v364
    %381 = vmatprep.subr.bf16.mxu0 0
    %382 = vmatpush1.bf16.msra.mxu0 %v363
    %383 = vmatprep.subr.bf16.mxu0 0
    %384 = vmatpush1.bf16.msra.mxu0 %v362
    %385 = vmatprep.subr.bf16.mxu0 0
    %386 = vmatpush1.bf16.msra.mxu0 %v361
    %387 = vmatprep.subr.bf16.mxu0 0
    %388 = vmatpush1.bf16.msra.mxu0 %v360
    %389 = vmatprep.subr.bf16.mxu0 0
    %390 = vmatpush1.bf16.msra.mxu0 %v359
    %391 = vmatprep.subr.bf16.mxu0 0
    %392 = vmatpush2.bf16.msra.mxu0 0
    %393 = vmatprep.subr.bf16.mxu0 0
    %394 = vmatpush2.bf16.msra.mxu0 0
    %395 = vmatprep.subr.bf16.mxu0 0
    %396 = vmatpush2.bf16.msra.mxu0 0
    %397 = vmatprep.subr.bf16.mxu0 0
    %398 = vmatpush2.bf16.msra.mxu0 0
    %399 = vmatprep.subr.bf16.mxu0 0
    %400 = vmatpush2.bf16.msra.mxu0 0
    %401 = vmatprep.subr.bf16.mxu0 0
    %402 = vmatpush2.bf16.msra.mxu0 0
    %403 = vmatprep.subr.bf16.mxu0 0
    %404 = vmatpush2.bf16.msra.mxu0 0
    %405 = vmatprep.subr.bf16.mxu0 0
    %406 = vmatpush2.bf16.msra.mxu0 0
    %407 = vmatprep.mubr.bf16.mxu0 0
    %408 = vmatmul.mubr.bf16.gmra.mxu0 %v303
    %v409 = vpop.f32.mrf.mxu0
    %v410 = vadd.f32 %v325, %v409
    %v411 = vpop.f32.mrf.mxu0
    %v412 = vpop.f32.mrf.mxu0
    %v413 = vadd.f32 %v325, %v412
    %v414 = vpop.f32.mrf.mxu0
    %415 = vdwg.mxu0
    %416 = vst [vmem:[%s7] sm:$0xff] %v410
    %417 = vst [vmem:[%s7 + $0x8] sm:$0xff] %v413
    // Predicated region
    $region38: #{hate_head_forward.1} parent=1 // pred_check
      _
    $region39: #{hate_head_forward.1} parent=1 // pred_check_branch
      %419 = sbr.rel (0) target = $region41
    $region40: #{hate_head_forward.1} parent=1 // pred_region
      _
    $region41: #{hate_head_forward.1} parent=1 // pred_fallthru
      _
    // Predicated region
    $region42: #{hate_head_forward.1} parent=1 // pred_check
      _
    $region43: #{hate_head_forward.1} parent=1 // pred_check_branch
      %421 = sbr.rel (0) target = $region45
    $region44: #{hate_head_forward.1} parent=1 // pred_region
      _
    $region45: #{hate_head_forward.1} parent=1 // pred_fallthru
      _
    %422 = vsyncpa [#allocation3], 1
    %423 = vsyncpa [#allocation5], 1

</llo_original>
